<compile_context>
chip_gen: v7x
topology: tpu7x:2x2x1
jax: 0.10.0
libtpu: 0.0.40
codegen_flags: <defaults>
</compile_context>

<pallas_src>
import functools

import jax
import jax.numpy as jnp
from jax.experimental import pallas as pl
from jax.experimental.pallas import tpu as pltpu


def _mlp_kernel(x_ref, w_in_ref, b_in_ref, wh_ref, bh_ref, w_out_ref, b_out_ref,
                o_ref, *, n_hidden, act):
    # x_ref: (tm, d_in) batch-major tile.  Contract on d_in (last axis of BOTH
    # operands); the result h is feature-major (H, tm) with the batch on lanes.
    # Input layer has NO activation (matches the torch forward).
    h = jax.lax.dot_general(
        w_in_ref[...], x_ref[...],
        dimension_numbers=(((1,), (1,)), ((), ())),
        preferred_element_type=jnp.float32) + b_in_ref[...]

    # Hidden layers: act(W_l @ h + b_l).  Statically unrolled over the small
    # depth (bias broadcasts stay hoisted; LLO scheduler sees the whole chain).
    for l in range(n_hidden):
        h = act(jnp.dot(wh_ref[l], h, preferred_element_type=jnp.float32)
                + bh_ref[l])

    # Output layer (no activation).  (d_out, tm) store is lane-dense.
    out = jnp.dot(w_out_ref[...], h,
                  preferred_element_type=jnp.float32) + b_out_ref[...]
    o_ref[...] = out.astype(o_ref.dtype)


def mlp_forward(x, params, *, activation=jnp.tanh, tm=None):
    """MLP forward in a single Pallas kernel.

    x: (N, d_in) float32  ->  (N, d_out) float32.
    Activations are kept feature-major in-kernel so the batch sits on lanes.
    """
    w_in, b_in, w_hid, b_hid, w_out, b_out = params
    N, d_in = x.shape
    H = w_in.shape[0]
    d_out = w_out.shape[0]
    L = w_hid.shape[0]

    # Row tile: collapse tiny batches to one step; otherwise use large tiles
    # (cap 8192) but keep >= 2 grid steps so v7x megacore can split rows.
    if tm is None:
        if N <= 1024:
            tm = N
        else:
            tm = min(8192, pl.cdiv(pl.cdiv(N, 2), 128) * 128)
    grid = (pl.cdiv(N, tm),)

    kernel = functools.partial(_mlp_kernel, n_hidden=L, act=activation)

    # Weight/bias blocks never change across the grid -> single-buffer them
    # (halves resident weight VMEM; decisive once H/L scale up on v7x's 64 MiB).
    const = pl.Buffered(1)

    # TODO(synk): for scaled-up configs (H >= 1024, L >= 8) the resident
    # (L, H, H) weight block exceeds VMEM even single-buffered; at that scale
    # add a layer grid axis ("arbitrary") instead of keeping all layers resident.
    grid_spec = pltpu.PrefetchScalarGridSpec(
        num_scalar_prefetch=0,
        grid=grid,
        in_specs=[
            pl.BlockSpec((tm, d_in), lambda i: (i, 0)),                        # x tile (batch, feat)
            pl.BlockSpec((H, d_in), lambda i: (0, 0), pipeline_mode=const),    # W_in  (out, in)
            pl.BlockSpec((H, 1), lambda i: (0, 0), pipeline_mode=const),       # b_in  (out, 1)
            pl.BlockSpec((L, H, H), lambda i: (0, 0, 0), pipeline_mode=const), # stacked hidden W
            pl.BlockSpec((L, H, 1), lambda i: (0, 0, 0), pipeline_mode=const), # stacked hidden b
            pl.BlockSpec((d_out, H), lambda i: (0, 0), pipeline_mode=const),   # W_out (out, in)
            pl.BlockSpec((d_out, 1), lambda i: (0, 0), pipeline_mode=const),   # b_out (out, 1)
        ],
        out_specs=pl.BlockSpec((d_out, tm), lambda i: (0, i)),                 # lane-dense output
    )

    flops = 2 * N * (d_in * H + L * H * H + H * d_out)
    transcendentals = N * L * H
    bytes_accessed = 4 * (N * (d_in + d_out)
                          + H * d_in + H
                          + L * H * H + L * H
                          + d_out * H + d_out)

    out_t = pl.pallas_call(
        kernel,
        out_shape=jax.ShapeDtypeStruct((d_out, N), x.dtype),
        grid_spec=grid_spec,
        compiler_params=pltpu.CompilerParams(
            dimension_semantics=("parallel",)),
        cost_estimate=pl.CostEstimate(
            flops=flops,
            transcendentals=transcendentals,
            bytes_accessed=bytes_accessed),
    )(x, w_in, b_in, w_hid, b_hid, w_out, b_out)

    # Only a tiny (d_out, N) transpose remains outside the kernel.
    return out_t.T


def init_params(key, input_size, output_size, hidden_layers, hidden_units):
    """Deterministic synthetic params in torch nn.Linear (out, in) layout."""
    ks = jax.random.split(key, 6)
    s_in = 1.0 / jnp.sqrt(jnp.float32(input_size))
    s_h = 1.0 / jnp.sqrt(jnp.float32(hidden_units))
    w_in = jax.random.uniform(ks[0], (hidden_units, input_size), jnp.float32,
                              -s_in, s_in)
    b_in = jax.random.uniform(ks[1], (hidden_units, 1), jnp.float32, -s_in, s_in)
    w_hid = jax.random.uniform(ks[2], (hidden_layers, hidden_units, hidden_units),
                               jnp.float32, -s_h, s_h)
    b_hid = jax.random.uniform(ks[3], (hidden_layers, hidden_units, 1),
                               jnp.float32, -s_h, s_h)
    w_out = jax.random.uniform(ks[4], (output_size, hidden_units), jnp.float32,
                               -s_h, s_h)
    b_out = jax.random.uniform(ks[5], (output_size, 1), jnp.float32, -s_h, s_h)
    return (w_in, b_in, w_hid, b_hid, w_out, b_out)


def mlp_reference(x, params, activation=jnp.tanh):
    w_in, b_in, w_hid, b_hid, w_out, b_out = params
    hp = jax.lax.Precision.HIGHEST
    h = jnp.dot(x, w_in.T, precision=hp) + b_in[:, 0]
    for l in range(w_hid.shape[0]):
        h = activation(jnp.dot(h, w_hid[l].T, precision=hp) + b_hid[l, :, 0])
    return jnp.dot(h, w_out.T, precision=hp) + b_out[:, 0]


if __name__ == "__main__":
    # Small PINN-like configuration: 3 coords in, 2 outputs (complex field),
    # 3 hidden layers of 32 units, tanh activation.
    input_size, output_size = 3, 2
    hidden_layers, hidden_units = 3, 32

    key = jax.random.PRNGKey(0)
    kx, kp = jax.random.split(key)
    params = init_params(kp, input_size, output_size, hidden_layers, hidden_units)

    # 1) Aligned batch -> single collapsed grid step.
    N = 256
    x = jax.random.normal(kx, (N, input_size), dtype=jnp.float32)
    out = jax.block_until_ready(mlp_forward(x, params, activation=jnp.tanh))
    ref = mlp_reference(x, params)
    assert out.shape == (N, output_size)
    assert jnp.allclose(out, ref, atol=3e-5, rtol=3e-5)

    # 2) Ragged batch, single tile (block shape == full array dims).
    N2 = 200
    x2 = jax.random.normal(kx, (N2, input_size), dtype=jnp.float32)
    out2 = jax.block_until_ready(mlp_forward(x2, params, activation=jnp.tanh))
    ref2 = mlp_reference(x2, params)
    assert out2.shape == (N2, output_size)
    assert jnp.allclose(out2, ref2, atol=3e-5, rtol=3e-5)

    # 3) Multi-tile grid with a partial last tile: exercises Pallas's masked
    #    partial-block read/write path that replaced the wrapper pad/slice.
    N3 = 300
    x3 = jax.random.normal(kx, (N3, input_size), dtype=jnp.float32)
    out3 = jax.block_until_ready(mlp_forward(x3, params, activation=jnp.tanh, tm=128))
    ref3 = mlp_reference(x3, params)
    assert out3.shape == (N3, output_size)
    assert jnp.allclose(out3, ref3, atol=3e-5, rtol=3e-5)

    print("KERNEL_OK")
</pallas_src>

<mosaic_0001>
module attributes {stable_mosaic.version = 11 : i64} {
  func.func @_mlp_kernel(%arg0: i32, %arg1: memref<256x3xf32, #tpu.memory_space<vmem>>, %arg2: memref<32x3xf32, #tpu.memory_space<vmem>>, %arg3: memref<32x1xf32, #tpu.memory_space<vmem>>, %arg4: memref<3x32x32xf32, #tpu.memory_space<vmem>>, %arg5: memref<3x32x1xf32, #tpu.memory_space<vmem>>, %arg6: memref<2x32xf32, #tpu.memory_space<vmem>>, %arg7: memref<2x1xf32, #tpu.memory_space<vmem>>, %arg8: memref<2x256xf32, #tpu.memory_space<vmem>>) attributes {dimension_semantics = [#tpu.dimension_semantics<parallel>], iteration_bounds = array<i64: 1>, scalar_prefetch = 0 : i64, scratch_operands = 0 : i64, tpu.core_type = #tpu.core_type<tc>, window_params = [{transform_indices = @transform_0, window_bounds = array<i64: 256, 3>}, {pipeline_mode = #tpu.pipeline_mode<synchronous>, transform_indices = @transform_1, window_bounds = array<i64: 32, 3>}, {pipeline_mode = #tpu.pipeline_mode<synchronous>, transform_indices = @transform_2, window_bounds = array<i64: 32, 1>}, {pipeline_mode = #tpu.pipeline_mode<synchronous>, transform_indices = @transform_3, window_bounds = array<i64: 3, 32, 32>}, {pipeline_mode = #tpu.pipeline_mode<synchronous>, transform_indices = @transform_4, window_bounds = array<i64: 3, 32, 1>}, {pipeline_mode = #tpu.pipeline_mode<synchronous>, transform_indices = @transform_5, window_bounds = array<i64: 2, 32>}, {pipeline_mode = #tpu.pipeline_mode<synchronous>, transform_indices = @transform_6, window_bounds = array<i64: 2, 1>}, {transform_indices = @transform_7, window_bounds = array<i64: 2, 256>}]} {
    %c0 = arith.constant 0 : index
    %c0_0 = arith.constant 0 : index
    %0 = vector.load %arg2[%c0, %c0_0] : memref<32x3xf32, #tpu.memory_space<vmem>>, vector<32x3xf32>
    %c0_1 = arith.constant 0 : index
    %c0_2 = arith.constant 0 : index
    %1 = vector.load %arg1[%c0_1, %c0_2] : memref<256x3xf32, #tpu.memory_space<vmem>>, vector<256x3xf32>
    %cst = arith.constant dense<0.000000e+00> : vector<32x256xf32>
    %2 = tpu.matmul %0, %1, %cst {dimension_numbers = #tpu.dot_dimension_numbers<[1], [1], [0], [0], [0, 0, 1, 0], [], []>} : vector<32x3xf32>, vector<256x3xf32>, vector<32x256xf32> -> vector<32x256xf32>
    %c0_3 = arith.constant 0 : index
    %c0_4 = arith.constant 0 : index
    %3 = vector.load %arg3[%c0_3, %c0_4] : memref<32x1xf32, #tpu.memory_space<vmem>>, vector<32x1xf32>
    %4 = vector.broadcast %3 : vector<32x1xf32> to vector<32x256xf32>
    %5 = arith.addf %2, %4 : vector<32x256xf32>
    %c0_5 = arith.constant 0 : index
    %c0_6 = arith.constant 0 : index
    %c0_7 = arith.constant 0 : index
    %6 = vector.load %arg4[%c0_5, %c0_6, %c0_7] : memref<3x32x32xf32, #tpu.memory_space<vmem>>, vector<1x32x32xf32>
    %7 = vector.shape_cast %6 : vector<1x32x32xf32> to vector<32x32xf32>
    %cst_8 = arith.constant dense<0.000000e+00> : vector<32x256xf32>
    %8 = tpu.matmul %7, %5, %cst_8 {dimension_numbers = #tpu.dot_dimension_numbers<[1], [0], [0], [1], [0, 0, 1, 1], [], []>} : vector<32x32xf32>, vector<32x256xf32>, vector<32x256xf32> -> vector<32x256xf32>
    %c0_9 = arith.constant 0 : index
    %c0_10 = arith.constant 0 : index
    %c0_11 = arith.constant 0 : index
    %9 = vector.load %arg5[%c0_9, %c0_10, %c0_11] : memref<3x32x1xf32, #tpu.memory_space<vmem>>, vector<1x32x1xf32>
    %10 = vector.shape_cast %9 : vector<1x32x1xf32> to vector<32x1xf32>
    %11 = vector.broadcast %10 : vector<32x1xf32> to vector<32x256xf32>
    %12 = arith.addf %8, %11 : vector<32x256xf32>
    %13 = math.tanh %12 : vector<32x256xf32>
    %c1 = arith.constant 1 : index
    %c0_12 = arith.constant 0 : index
    %c0_13 = arith.constant 0 : index
    %14 = vector.load %arg4[%c1, %c0_12, %c0_13] : memref<3x32x32xf32, #tpu.memory_space<vmem>>, vector<1x32x32xf32>
    %15 = vector.shape_cast %14 : vector<1x32x32xf32> to vector<32x32xf32>
    %cst_14 = arith.constant dense<0.000000e+00> : vector<32x256xf32>
    %16 = tpu.matmul %15, %13, %cst_14 {dimension_numbers = #tpu.dot_dimension_numbers<[1], [0], [0], [1], [0, 0, 1, 1], [], []>} : vector<32x32xf32>, vector<32x256xf32>, vector<32x256xf32> -> vector<32x256xf32>
    %c1_15 = arith.constant 1 : index
    %c0_16 = arith.constant 0 : index
    %c0_17 = arith.constant 0 : index
    %17 = vector.load %arg5[%c1_15, %c0_16, %c0_17] : memref<3x32x1xf32, #tpu.memory_space<vmem>>, vector<1x32x1xf32>
    %18 = vector.shape_cast %17 : vector<1x32x1xf32> to vector<32x1xf32>
    %19 = vector.broadcast %18 : vector<32x1xf32> to vector<32x256xf32>
    %20 = arith.addf %16, %19 : vector<32x256xf32>
    %21 = math.tanh %20 : vector<32x256xf32>
    %c2 = arith.constant 2 : index
    %c0_18 = arith.constant 0 : index
    %c0_19 = arith.constant 0 : index
    %22 = vector.load %arg4[%c2, %c0_18, %c0_19] : memref<3x32x32xf32, #tpu.memory_space<vmem>>, vector<1x32x32xf32>
    %23 = vector.shape_cast %22 : vector<1x32x32xf32> to vector<32x32xf32>
    %cst_20 = arith.constant dense<0.000000e+00> : vector<32x256xf32>
    %24 = tpu.matmul %23, %21, %cst_20 {dimension_numbers = #tpu.dot_dimension_numbers<[1], [0], [0], [1], [0, 0, 1, 1], [], []>} : vector<32x32xf32>, vector<32x256xf32>, vector<32x256xf32> -> vector<32x256xf32>
    %c2_21 = arith.constant 2 : index
    %c0_22 = arith.constant 0 : index
    %c0_23 = arith.constant 0 : index
    %25 = vector.load %arg5[%c2_21, %c0_22, %c0_23] : memref<3x32x1xf32, #tpu.memory_space<vmem>>, vector<1x32x1xf32>
    %26 = vector.shape_cast %25 : vector<1x32x1xf32> to vector<32x1xf32>
    %27 = vector.broadcast %26 : vector<32x1xf32> to vector<32x256xf32>
    %28 = arith.addf %24, %27 : vector<32x256xf32>
    %29 = math.tanh %28 : vector<32x256xf32>
    %c0_24 = arith.constant 0 : index
    %c0_25 = arith.constant 0 : index
    %30 = vector.load %arg6[%c0_24, %c0_25] : memref<2x32xf32, #tpu.memory_space<vmem>>, vector<2x32xf32>
    %cst_26 = arith.constant dense<0.000000e+00> : vector<2x256xf32>
    %31 = tpu.matmul %30, %29, %cst_26 {dimension_numbers = #tpu.dot_dimension_numbers<[1], [0], [0], [1], [0, 0, 1, 1], [], []>} : vector<2x32xf32>, vector<32x256xf32>, vector<2x256xf32> -> vector<2x256xf32>
    %c0_27 = arith.constant 0 : index
    %c0_28 = arith.constant 0 : index
    %32 = vector.load %arg7[%c0_27, %c0_28] : memref<2x1xf32, #tpu.memory_space<vmem>>, vector<2x1xf32>
    %33 = vector.broadcast %32 : vector<2x1xf32> to vector<2x256xf32>
    %34 = arith.addf %31, %33 : vector<2x256xf32>
    %c0_29 = arith.constant 0 : index
    %c0_30 = arith.constant 0 : index
    %35 = vector.load %arg8[%c0_29, %c0_30] : memref<2x256xf32, #tpu.memory_space<vmem>>, vector<2x256xf32>
    tpu.vector_store %arg8[%c0_29, %c0_30], %34 {strides = array<i32>} : memref<2x256xf32, #tpu.memory_space<vmem>>, vector<2x256xf32>,
    return
  }
  func.func @transform_0(%arg0: i32) -> (i32, i32) {
    %c0_i32 = arith.constant 0 : i32
    %c0_i32_0 = arith.constant 0 : i32
    return %arg0, %c0_i32 : i32, i32
  }
  func.func @transform_1(%arg0: i32) -> (i32, i32) {
    %c0_i32 = arith.constant 0 : i32
    %c0_i32_0 = arith.constant 0 : i32
    %c0_i32_1 = arith.constant 0 : i32
    return %c0_i32, %c0_i32_0 : i32, i32
  }
  func.func @transform_2(%arg0: i32) -> (i32, i32) {
    %c0_i32 = arith.constant 0 : i32
    %c0_i32_0 = arith.constant 0 : i32
    %c0_i32_1 = arith.constant 0 : i32
    return %c0_i32, %c0_i32_0 : i32, i32
  }
  func.func @transform_3(%arg0: i32) -> (i32, i32, i32) {
    %c0_i32 = arith.constant 0 : i32
    %c0_i32_0 = arith.constant 0 : i32
    %c0_i32_1 = arith.constant 0 : i32
    %c0_i32_2 = arith.constant 0 : i32
    return %c0_i32, %c0_i32_0, %c0_i32_1 : i32, i32, i32
  }
  func.func @transform_4(%arg0: i32) -> (i32, i32, i32) {
    %c0_i32 = arith.constant 0 : i32
    %c0_i32_0 = arith.constant 0 : i32
    %c0_i32_1 = arith.constant 0 : i32
    %c0_i32_2 = arith.constant 0 : i32
    return %c0_i32, %c0_i32_0, %c0_i32_1 : i32, i32, i32
  }
  func.func @transform_5(%arg0: i32) -> (i32, i32) {
    %c0_i32 = arith.constant 0 : i32
    %c0_i32_0 = arith.constant 0 : i32
    %c0_i32_1 = arith.constant 0 : i32
    return %c0_i32, %c0_i32_0 : i32, i32
  }
  func.func @transform_6(%arg0: i32) -> (i32, i32) {
    %c0_i32 = arith.constant 0 : i32
    %c0_i32_0 = arith.constant 0 : i32
    %c0_i32_1 = arith.constant 0 : i32
    return %c0_i32, %c0_i32_0 : i32, i32
  }
  func.func @transform_7(%arg0: i32) -> (i32, i32) {
    %c0_i32 = arith.constant 0 : i32
    %c0_i32_0 = arith.constant 0 : i32
    return %c0_i32, %arg0 : i32, i32
  }
}

</mosaic_0001>

<llo_original>
// kernel: tpu_custom_call.1
$region0: #{tpu_custom_call.1}
  #allocation0 [shape = 'u32[]', space=smem, size = 0x4, offset = 0x4, fixed_abs, tag = 'smem constant byte address 0x4 - core index']
  #allocation1 [shape = 'u32[144,128]{1,0:T(1,128)}', space=vmem, size = 0x12000, scoped, tag = 'internal scratch']
  %s0 = inlined_call_operand.vmem [shape: f32[256,3], index: 0, kind: input, shape index: {}]
  %s1 = inlined_call_operand.vmem [shape: f32[32,3], index: 1, kind: input, shape index: {}]
  %s2 = inlined_call_operand.vmem [shape: f32[32,1], index: 2, kind: input, shape index: {}]
  %s3 = inlined_call_operand.vmem [shape: f32[3,32,32], index: 3, kind: input, shape index: {}]
  %s4 = inlined_call_operand.vmem [shape: f32[3,32,1], index: 4, kind: input, shape index: {}]
  %s5 = inlined_call_operand.vmem [shape: f32[2,32], index: 5, kind: input, shape index: {}]
  %s6 = inlined_call_operand.vmem [shape: f32[2,1], index: 6, kind: input, shape index: {}]
  %s7 = inlined_call_operand.hbm [shape: f32[2,256], index: 7, kind: output, shape index: {}]
  %s8 = sld [smem:[#allocation0]]
  $region38: #{tpu_custom_call.1} parent=0
    _
  %s10 = ssub.s32 1, %s8
  %s11 = scalar_select 0, %s10, %s8
  $region1: #{tpu_custom_call.1} parent=0
    #allocation2 [shape = 'u8[2048]{0}', space=vmem, size = 0x800, scoped, tag = 'output window, operand 0, single buffered']
    #allocation3 [shape = 's32[1]{0}', space=sflag, size = 0x4, scoped, tag = 'scoped memory for tpu_custom_call.1']
    %12 = vsyncpa [#allocation3], 0
    // Predicated region
    $region2: #{tpu_custom_call.1} parent=1 // pred_check
      _
    $region3: #{tpu_custom_call.1} parent=1 // pred_check_branch
      %14 = sbr.rel (0) target = $region5
    $region4: #{tpu_custom_call.1} parent=1 // pred_region
      _
    $region5: #{tpu_custom_call.1} parent=1 // pred_fallthru
      _
    // Predicated region
    $region6: #{tpu_custom_call.1} parent=1 // pred_check
      _
    $region7: #{tpu_custom_call.1} parent=1 // pred_check_branch
      %16 = sbr.rel (0) target = $region9
    $region8: #{tpu_custom_call.1} parent=1 // pred_region
      _
    $region9: #{tpu_custom_call.1} parent=1 // pred_fallthru
      _
    // Predicated region
    $region10: #{tpu_custom_call.1} parent=1 // pred_check
      _
    $region11: #{tpu_custom_call.1} parent=1 // pred_check_branch
      %18 = sbr.rel (0) target = $region13
    $region12: #{tpu_custom_call.1} parent=1 // pred_region
      _
    $region13: #{tpu_custom_call.1} parent=1 // pred_fallthru
      _
    // Predicated region
    $region14: #{tpu_custom_call.1} parent=1 // pred_check
      _
    $region15: #{tpu_custom_call.1} parent=1 // pred_check_branch
      %20 = sbr.rel (0) target = $region17
    $region16: #{tpu_custom_call.1} parent=1 // pred_region
      _
    $region17: #{tpu_custom_call.1} parent=1 // pred_fallthru
      _
    // Predicated region
    $region18: #{tpu_custom_call.1} parent=1 // pred_check
      _
    $region19: #{tpu_custom_call.1} parent=1 // pred_check_branch
      %22 = sbr.rel (0) target = $region21
    $region20: #{tpu_custom_call.1} parent=1 // pred_region
      _
    $region21: #{tpu_custom_call.1} parent=1 // pred_fallthru
      _
    // Predicated region
    $region22: #{tpu_custom_call.1} parent=1 // pred_check
      _
    $region23: #{tpu_custom_call.1} parent=1 // pred_check_branch
      %24 = sbr.rel (0) target = $region25
    $region24: #{tpu_custom_call.1} parent=1 // pred_region
      _
    $region25: #{tpu_custom_call.1} parent=1 // pred_fallthru
      _
    // Predicated region
    $region26: #{tpu_custom_call.1} parent=1 // pred_check
      _
    $region27: #{tpu_custom_call.1} parent=1 // pred_check_branch
      %26 = sbr.rel (0) target = $region29
    $region28: #{tpu_custom_call.1} parent=1 // pred_region
      _
    $region29: #{tpu_custom_call.1} parent=1 // pred_fallthru
      _
    %v27 = vld [vmem:[%s1] sm:$0xff]
    %v28 = vld [vmem:[%s1 + $0x8] sm:$0xff]
    %v29 = vld [vmem:[%s1 + $0x10] sm:$0xff]
    %v30 = vld [vmem:[%s1 + $0x18] sm:$0xff]
    %v31 = vld [vmem:[%s0] sm:$0xff]
    %v32 = vld [vmem:[%s0 + $0x8] sm:$0xff]
    %v33 = vld [vmem:[%s0 + $0x10] sm:$0xff]
    %v34 = vld [vmem:[%s0 + $0x18] sm:$0xff]
    %v35 = vld [vmem:[%s0 + $0x20] sm:$0xff]
    %v36 = vld [vmem:[%s0 + $0x28] sm:$0xff]
    %v37 = vld [vmem:[%s0 + $0x30] sm:$0xff]
    %v38 = vld [vmem:[%s0 + $0x38] sm:$0xff]
    %v39 = vld [vmem:[%s0 + $0x40] sm:$0xff]
    %v40 = vld [vmem:[%s0 + $0x48] sm:$0xff]
    %v41 = vld [vmem:[%s0 + $0x50] sm:$0xff]
    %v42 = vld [vmem:[%s0 + $0x58] sm:$0xff]
    %v43 = vld [vmem:[%s0 + $0x60] sm:$0xff]
    %v44 = vld [vmem:[%s0 + $0x68] sm:$0xff]
    %v45 = vld [vmem:[%s0 + $0x70] sm:$0xff]
    %v46 = vld [vmem:[%s0 + $0x78] sm:$0xff]
    %v47 = vld [vmem:[%s0 + $0x80] sm:$0xff]
    %v48 = vld [vmem:[%s0 + $0x88] sm:$0xff]
    %v49 = vld [vmem:[%s0 + $0x90] sm:$0xff]
    %v50 = vld [vmem:[%s0 + $0x98] sm:$0xff]
    %v51 = vld [vmem:[%s0 + $0xa0] sm:$0xff]
    %v52 = vld [vmem:[%s0 + $0xa8] sm:$0xff]
    %v53 = vld [vmem:[%s0 + $0xb0] sm:$0xff]
    %v54 = vld [vmem:[%s0 + $0xb8] sm:$0xff]
    %v55 = vld [vmem:[%s0 + $0xc0] sm:$0xff]
    %v56 = vld [vmem:[%s0 + $0xc8] sm:$0xff]
    %v57 = vld [vmem:[%s0 + $0xd0] sm:$0xff]
    %v58 = vld [vmem:[%s0 + $0xd8] sm:$0xff]
    %v59 = vld [vmem:[%s0 + $0xe0] sm:$0xff]
    %v60 = vld [vmem:[%s0 + $0xe8] sm:$0xff]
    %v61 = vld [vmem:[%s0 + $0xf0] sm:$0xff]
    %v62 = vld [vmem:[%s0 + $0xf8] sm:$0xff]
    %v63 = vld [vmem:[%s2] sm:$0xff]
    %v64 = vld [vmem:[%s2 + $0x8] sm:$0xff]
    %v65 = vld [vmem:[%s2 + $0x10] sm:$0xff]
    %v66 = vld [vmem:[%s2 + $0x18] sm:$0xff]
    %68 = vset.pattern.permute.xlu0 0
    %69 = vperm.xlu0 %68, %v63
    %v70 = vpop.permute.xlu0 %69
    %73 = vset.pattern.permute.xlu0 0
    %74 = vperm.xlu0 %73, %v64
    %v75 = vpop.permute.xlu0 %74
    %78 = vset.pattern.permute.xlu0 0
    %79 = vperm.xlu0 %78, %v65
    %v80 = vpop.permute.xlu0 %79
    %83 = vset.pattern.permute.xlu0 0
    %84 = vperm.xlu0 %83, %v66
    %v85 = vpop.permute.xlu0 %84
    %vm87 = vcmask 23552
    %v89 = vsel %vm87, %v27, 0
    %v92 = vsel %vm87, %v28, 0
    %v95 = vsel %vm87, %v29, 0
    %v98 = vsel %vm87, %v30, 0
    %v101 = vsel %vm87, %v31, 0
    %v104 = vsel %vm87, %v32, 0
    %v107 = vsel %vm87, %v33, 0
    %v110 = vsel %vm87, %v34, 0
    %v113 = vsel %vm87, %v35, 0
    %v116 = vsel %vm87, %v36, 0
    %v119 = vsel %vm87, %v37, 0
    %v122 = vsel %vm87, %v38, 0
    %v125 = vsel %vm87, %v39, 0
    %v128 = vsel %vm87, %v40, 0
    %v131 = vsel %vm87, %v41, 0
    %v134 = vsel %vm87, %v42, 0
    %v137 = vsel %vm87, %v43, 0
    %v140 = vsel %vm87, %v44, 0
    %v143 = vsel %vm87, %v45, 0
    %v146 = vsel %vm87, %v46, 0
    %v149 = vsel %vm87, %v47, 0
    %v152 = vsel %vm87, %v48, 0
    %v155 = vsel %vm87, %v49, 0
    %v158 = vsel %vm87, %v50, 0
    %v161 = vsel %vm87, %v51, 0
    %v164 = vsel %vm87, %v52, 0
    %v167 = vsel %vm87, %v53, 0
    %v170 = vsel %vm87, %v54, 0
    %v173 = vsel %vm87, %v55, 0
    %v176 = vsel %vm87, %v56, 0
    %v179 = vsel %vm87, %v57, 0
    %v182 = vsel %vm87, %v58, 0
    %v185 = vsel %vm87, %v59, 0
    %v188 = vsel %vm87, %v60, 0
    %v191 = vsel %vm87, %v61, 0
    %v194 = vsel %vm87, %v62, 0
    %196 = vmatprep.subr.mxu0 0.0
    %197 = vmatpush1.xpose.msra.mxu0 %v101
    %198 = vmatprep.subr.mxu0 0.0
    %199 = vmatpush1.xpose.msra.mxu0 %v104
    %200 = vmatprep.subr.mxu0 0.0
    %201 = vmatpush1.xpose.msra.mxu0 %v107
    %202 = vmatprep.subr.mxu0 0.0
    %203 = vmatpush1.xpose.msra.mxu0 %v110
    %204 = vmatprep.subr.mxu0 0.0
    %205 = vmatpush1.xpose.msra.mxu0 %v113
    %206 = vmatprep.subr.mxu0 0.0
    %207 = vmatpush1.xpose.msra.mxu0 %v116
    %208 = vmatprep.subr.mxu0 0.0
    %209 = vmatpush1.xpose.msra.mxu0 %v119
    %210 = vmatprep.subr.mxu0 0.0
    %211 = vmatpush1.xpose.msra.mxu0 %v122
    %212 = vmatprep.subr.mxu0 0.0
    %213 = vmatpush1.xpose.msra.mxu0 %v125
    %214 = vmatprep.subr.mxu0 0.0
    %215 = vmatpush1.xpose.msra.mxu0 %v128
    %216 = vmatprep.subr.mxu0 0.0
    %217 = vmatpush1.xpose.msra.mxu0 %v131
    %218 = vmatprep.subr.mxu0 0.0
    %219 = vmatpush1.xpose.msra.mxu0 %v134
    %220 = vmatprep.subr.mxu0 0.0
    %221 = vmatpush1.xpose.msra.mxu0 %v137
    %222 = vmatprep.subr.mxu0 0.0
    %223 = vmatpush1.xpose.msra.mxu0 %v140
    %224 = vmatprep.subr.mxu0 0.0
    %225 = vmatpush1.xpose.msra.mxu0 %v143
    %226 = vmatprep.subr.mxu0 0.0
    %227 = vmatpush1.xpose.msra.mxu0 %v146
    %228 = vmatprep.subr.mxu0 0.0
    %229 = vmatpush1.xpose.msra.mxu0 %v149
    %230 = vmatprep.subr.mxu0 0.0
    %231 = vmatpush1.xpose.msra.mxu0 %v152
    %232 = vmatprep.subr.mxu0 0.0
    %233 = vmatpush1.xpose.msra.mxu0 %v155
    %234 = vmatprep.subr.mxu0 0.0
    %235 = vmatpush1.xpose.msra.mxu0 %v158
    %236 = vmatprep.subr.mxu0 0.0
    %237 = vmatpush1.xpose.msra.mxu0 %v161
    %238 = vmatprep.subr.mxu0 0.0
    %239 = vmatpush1.xpose.msra.mxu0 %v164
    %240 = vmatprep.subr.mxu0 0.0
    %241 = vmatpush1.xpose.msra.mxu0 %v167
    %242 = vmatprep.subr.mxu0 0.0
    %243 = vmatpush1.xpose.msra.mxu0 %v170
    %244 = vmatprep.subr.mxu0 0.0
    %245 = vmatpush1.xpose.msra.mxu0 %v173
    %246 = vmatprep.subr.mxu0 0.0
    %247 = vmatpush1.xpose.msra.mxu0 %v176
    %248 = vmatprep.subr.mxu0 0.0
    %249 = vmatpush1.xpose.msra.mxu0 %v179
    %250 = vmatprep.subr.mxu0 0.0
    %251 = vmatpush1.xpose.msra.mxu0 %v182
    %252 = vmatprep.subr.mxu0 0.0
    %253 = vmatpush1.xpose.msra.mxu0 %v185
    %254 = vmatprep.subr.mxu0 0.0
    %255 = vmatpush1.xpose.msra.mxu0 %v188
    %256 = vmatprep.subr.mxu0 0.0
    %257 = vmatpush1.xpose.msra.mxu0 %v191
    %258 = vmatprep.subr.mxu0 0.0
    %259 = vmatpush1.xpose.msra.mxu0 %v194
    %260 = vmatprep.mubr.f32.mxu0 0.0
    %261 = vmatmul.mubr.f32.gmra.mrb[0].mxu0 %v89
    %v262 = vpop.f32.mrb[0].mxu0
    %v263 = vadd.f32 %v70, %v262
    %v264 = vpop.f32.mrb[0].mxu0
    %v265 = vadd.f32 %v70, %v264
    %266 = vmatprep.mubr.f32.mxu0 0.0
    %267 = vmatmul.mubr.f32.gmra.mrb[0].mxu0 %v92
    %v268 = vpop.f32.mrb[0].mxu0
    %v269 = vadd.f32 %v75, %v268
    %v270 = vpop.f32.mrb[0].mxu0
    %v271 = vadd.f32 %v75, %v270
    %272 = vmatprep.mubr.f32.mxu0 0.0
    %273 = vmatmul.mubr.f32.gmra.mrb[0].mxu0 %v95
    %v274 = vpop.f32.mrb[0].mxu0
    %v275 = vadd.f32 %v80, %v274
    %v276 = vpop.f32.mrb[0].mxu0
    %v277 = vadd.f32 %v80, %v276
    %278 = vmatprep.mubr.f32.mxu0 0.0
    %279 = vmatmul.mubr.f32.gmra.mrb[0].mxu0 %v98
    %v280 = vpop.f32.mrb[0].mxu0
    %v281 = vadd.f32 %v85, %v280
    %v282 = vpop.f32.mrb[0].mxu0
    %v283 = vadd.f32 %v85, %v282
    %284 = vdwg.mxu0
    %v285 = vld [vmem:[%s3] sm:$0xff]
    %v286 = vld [vmem:[%s3 + $0x8] sm:$0xff]
    %v287 = vld [vmem:[%s3 + $0x10] sm:$0xff]
    %v288 = vld [vmem:[%s3 + $0x18] sm:$0xff]
    %v289 = vld [vmem:[%s4] sm:$0xff]
    %v290 = vld [vmem:[%s4 + $0x8] sm:$0xff]
    %v291 = vld [vmem:[%s4 + $0x10] sm:$0xff]
    %v292 = vld [vmem:[%s4 + $0x18] sm:$0xff]
    %294 = vset.pattern.permute.xlu0 0
    %295 = vperm.xlu0 %294, %v289
    %v296 = vpop.permute.xlu0 %295
    %299 = vset.pattern.permute.xlu0 0
    %300 = vperm.xlu0 %299, %v290
    %v301 = vpop.permute.xlu0 %300
    %304 = vset.pattern.permute.xlu0 0
    %305 = vperm.xlu0 %304, %v291
    %v306 = vpop.permute.xlu0 %305
    %309 = vset.pattern.permute.xlu0 0
    %310 = vperm.xlu0 %309, %v292
    %v311 = vpop.permute.xlu0 %310
    %vm313 = vcmask 261120
    %v315 = vsel %vm313, %v285, 0
    %v318 = vsel %vm313, %v286, 0
    %v321 = vsel %vm313, %v287, 0
    %v324 = vsel %vm313, %v288, 0
    %326 = vmatprep.subr.mxu0 %v265
    %327 = vmatpush1.msra.mxu0 %v263
    %328 = vmatprep.subr.mxu0 %v271
    %329 = vmatpush1.msra.mxu0 %v269
    %330 = vmatprep.subr.mxu0 %v277
    %331 = vmatpush1.msra.mxu0 %v275
    %332 = vmatprep.subr.mxu0 %v283
    %333 = vmatpush1.msra.mxu0 %v281
    %334 = vmatprep.subr.mxu0 0.0
    %335 = vmatpush1.msra.mxu0 0.0
    %336 = vmatprep.subr.mxu0 0.0
    %337 = vmatpush1.msra.mxu0 0.0
    %338 = vmatprep.subr.mxu0 0.0
    %339 = vmatpush1.msra.mxu0 0.0
    %340 = vmatprep.subr.mxu0 0.0
    %341 = vmatpush1.msra.mxu0 0.0
    %342 = vmatprep.subr.mxu0 0.0
    %343 = vmatpush1.msra.mxu0 0.0
    %344 = vmatprep.subr.mxu0 0.0
    %345 = vmatpush1.msra.mxu0 0.0
    %346 = vmatprep.subr.mxu0 0.0
    %347 = vmatpush1.msra.mxu0 0.0
    %348 = vmatprep.subr.mxu0 0.0
    %349 = vmatpush1.msra.mxu0 0.0
    %350 = vmatprep.subr.mxu0 0.0
    %351 = vmatpush1.msra.mxu0 0.0
    %352 = vmatprep.subr.mxu0 0.0
    %353 = vmatpush1.msra.mxu0 0.0
    %354 = vmatprep.subr.mxu0 0.0
    %355 = vmatpush1.msra.mxu0 0.0
    %356 = vmatprep.subr.mxu0 0.0
    %357 = vmatpush1.msra.mxu0 0.0
    %358 = vmatprep.subr.mxu0 0.0
    %359 = vmatpush1.msra.mxu0 0.0
    %360 = vmatprep.subr.mxu0 0.0
    %361 = vmatpush1.msra.mxu0 0.0
    %362 = vmatprep.subr.mxu0 0.0
    %363 = vmatpush1.msra.mxu0 0.0
    %364 = vmatprep.subr.mxu0 0.0
    %365 = vmatpush1.msra.mxu0 0.0
    %366 = vmatprep.subr.mxu0 0.0
    %367 = vmatpush1.msra.mxu0 0.0
    %368 = vmatprep.subr.mxu0 0.0
    %369 = vmatpush1.msra.mxu0 0.0
    %370 = vmatprep.subr.mxu0 0.0
    %371 = vmatpush1.msra.mxu0 0.0
    %372 = vmatprep.subr.mxu0 0.0
    %373 = vmatpush1.msra.mxu0 0.0
    %374 = vmatprep.subr.mxu0 0.0
    %375 = vmatpush1.msra.mxu0 0.0
    %376 = vmatprep.subr.mxu0 0.0
    %377 = vmatpush1.msra.mxu0 0.0
    %378 = vmatprep.subr.mxu0 0.0
    %379 = vmatpush1.msra.mxu0 0.0
    %380 = vmatprep.subr.mxu0 0.0
    %381 = vmatpush1.msra.mxu0 0.0
    %382 = vmatprep.subr.mxu0 0.0
    %383 = vmatpush1.msra.mxu0 0.0
    %384 = vmatprep.subr.mxu0 0.0
    %385 = vmatpush1.msra.mxu0 0.0
    %386 = vmatprep.subr.mxu0 0.0
    %387 = vmatpush1.msra.mxu0 0.0
    %388 = vmatprep.subr.mxu0 0.0
    %389 = vmatpush1.msra.mxu0 0.0
    %390 = vmatprep.mubr.f32.mxu0 0.0
    %391 = vmatmul.mubr.f32.gmra.mrb[0].mxu0 %v315
    %v392 = vpop.f32.mrb[0].mxu0
    %v393 = vadd.f32 %v296, %v392
    %v394 = vpop.f32.mrb[0].mxu0
    %v395 = vadd.f32 %v296, %v394
    %396 = vmatprep.mubr.f32.mxu0 0.0
    %397 = vmatmul.mubr.f32.gmra.mrb[0].mxu0 %v318
    %v398 = vpop.f32.mrb[0].mxu0
    %v399 = vadd.f32 %v301, %v398
    %v400 = vpop.f32.mrb[0].mxu0
    %v401 = vadd.f32 %v301, %v400
    %402 = vmatprep.mubr.f32.mxu0 0.0
    %403 = vmatmul.mubr.f32.gmra.mrb[0].mxu0 %v321
    %v404 = vpop.f32.mrb[0].mxu0
    %v405 = vadd.f32 %v306, %v404
    %v406 = vpop.f32.mrb[0].mxu0
    %v407 = vadd.f32 %v306, %v406
    %408 = vmatprep.mubr.f32.mxu0 0.0
    %409 = vmatmul.mubr.f32.gmra.mrb[0].mxu0 %v324
    %v410 = vpop.f32.mrb[0].mxu0
    %v411 = vadd.f32 %v311, %v410
    %v412 = vpop.f32.mrb[0].mxu0
    %v413 = vadd.f32 %v311, %v412
    %414 = vdwg.mxu0
    %v415 = vtanh.pop %v393
    %v416 = vtanh.pop %v395
    %v417 = vtanh.pop %v399
    %v418 = vtanh.pop %v401
    %v419 = vtanh.pop %v405
    %v420 = vtanh.pop %v407
    %v421 = vtanh.pop %v411
    %v422 = vtanh.pop %v413
    %s423 = scalar_lea.vmem %s3, 32
    %v424 = vld [vmem:[%s423] sm:$0xff]
    %v425 = vld [vmem:[%s423 + $0x8] sm:$0xff]
    %v426 = vld [vmem:[%s423 + $0x10] sm:$0xff]
    %v427 = vld [vmem:[%s423 + $0x18] sm:$0xff]
    %s428 = scalar_lea.vmem %s4, 32
    %v429 = vld [vmem:[%s428] sm:$0xff]
    %v430 = vld [vmem:[%s428 + $0x8] sm:$0xff]
    %v431 = vld [vmem:[%s428 + $0x10] sm:$0xff]
    %v432 = vld [vmem:[%s428 + $0x18] sm:$0xff]
    %434 = vset.pattern.permute.xlu0 0
    %435 = vperm.xlu0 %434, %v429
    %v436 = vpop.permute.xlu0 %435
    %439 = vset.pattern.permute.xlu0 0
    %440 = vperm.xlu0 %439, %v430
    %v441 = vpop.permute.xlu0 %440
    %444 = vset.pattern.permute.xlu0 0
    %445 = vperm.xlu0 %444, %v431
    %v446 = vpop.permute.xlu0 %445
    %449 = vset.pattern.permute.xlu0 0
    %450 = vperm.xlu0 %449, %v432
    %v451 = vpop.permute.xlu0 %450
    %v454 = vsel %vm313, %v424, 0
    %v457 = vsel %vm313, %v425, 0
    %v460 = vsel %vm313, %v426, 0
    %v463 = vsel %vm313, %v427, 0
    %465 = vmatprep.subr.mxu0 %v416
    %466 = vmatpush1.msra.mxu0 %v415
    %467 = vmatprep.subr.mxu0 %v418
    %468 = vmatpush1.msra.mxu0 %v417
    %469 = vmatprep.subr.mxu0 %v420
    %470 = vmatpush1.msra.mxu0 %v419
    %471 = vmatprep.subr.mxu0 %v422
    %472 = vmatpush1.msra.mxu0 %v421
    %473 = vmatprep.subr.mxu0 0.0
    %474 = vmatpush1.msra.mxu0 0.0
    %475 = vmatprep.subr.mxu0 0.0
    %476 = vmatpush1.msra.mxu0 0.0
    %477 = vmatprep.subr.mxu0 0.0
    %478 = vmatpush1.msra.mxu0 0.0
    %479 = vmatprep.subr.mxu0 0.0
    %480 = vmatpush1.msra.mxu0 0.0
    %481 = vmatprep.subr.mxu0 0.0
    %482 = vmatpush1.msra.mxu0 0.0
    %483 = vmatprep.subr.mxu0 0.0
    %484 = vmatpush1.msra.mxu0 0.0
    %485 = vmatprep.subr.mxu0 0.0
    %486 = vmatpush1.msra.mxu0 0.0
    %487 = vmatprep.subr.mxu0 0.0
    %488 = vmatpush1.msra.mxu0 0.0
    %489 = vmatprep.subr.mxu0 0.0
    %490 = vmatpush1.msra.mxu0 0.0
    %491 = vmatprep.subr.mxu0 0.0
    %492 = vmatpush1.msra.mxu0 0.0
    %493 = vmatprep.subr.mxu0 0.0
    %494 = vmatpush1.msra.mxu0 0.0
    %495 = vmatprep.subr.mxu0 0.0
    %496 = vmatpush1.msra.mxu0 0.0
    %497 = vmatprep.subr.mxu0 0.0
    %498 = vmatpush1.msra.mxu0 0.0
    %499 = vmatprep.subr.mxu0 0.0
    %500 = vmatpush1.msra.mxu0 0.0
    %501 = vmatprep.subr.mxu0 0.0
    %502 = vmatpush1.msra.mxu0 0.0
    %503 = vmatprep.subr.mxu0 0.0
    %504 = vmatpush1.msra.mxu0 0.0
    %505 = vmatprep.subr.mxu0 0.0
    %506 = vmatpush1.msra.mxu0 0.0
    %507 = vmatprep.subr.mxu0 0.0
    %508 = vmatpush1.msra.mxu0 0.0
    %509 = vmatprep.subr.mxu0 0.0
    %510 = vmatpush1.msra.mxu0 0.0
    %511 = vmatprep.subr.mxu0 0.0
    %512 = vmatpush1.msra.mxu0 0.0
    %513 = vmatprep.subr.mxu0 0.0
    %514 = vmatpush1.msra.mxu0 0.0
    %515 = vmatprep.subr.mxu0 0.0
    %516 = vmatpush1.msra.mxu0 0.0
    %517 = vmatprep.subr.mxu0 0.0
    %518 = vmatpush1.msra.mxu0 0.0
    %519 = vmatprep.subr.mxu0 0.0
    %520 = vmatpush1.msra.mxu0 0.0
    %521 = vmatprep.subr.mxu0 0.0
    %522 = vmatpush1.msra.mxu0 0.0
    %523 = vmatprep.subr.mxu0 0.0
    %524 = vmatpush1.msra.mxu0 0.0
    %525 = vmatprep.subr.mxu0 0.0
    %526 = vmatpush1.msra.mxu0 0.0
    %527 = vmatprep.subr.mxu0 0.0
    %528 = vmatpush1.msra.mxu0 0.0
    %529 = vmatprep.mubr.f32.mxu0 0.0
    %530 = vmatmul.mubr.f32.gmra.mrb[0].mxu0 %v454
    %v531 = vpop.f32.mrb[0].mxu0
    %v532 = vadd.f32 %v436, %v531
    %v533 = vpop.f32.mrb[0].mxu0
    %v534 = vadd.f32 %v436, %v533
    %535 = vmatprep.mubr.f32.mxu0 0.0
    %536 = vmatmul.mubr.f32.gmra.mrb[0].mxu0 %v457
    %v537 = vpop.f32.mrb[0].mxu0
    %v538 = vadd.f32 %v441, %v537
    %v539 = vpop.f32.mrb[0].mxu0
    %v540 = vadd.f32 %v441, %v539
    %541 = vmatprep.mubr.f32.mxu0 0.0
    %542 = vmatmul.mubr.f32.gmra.mrb[0].mxu0 %v460
    %v543 = vpop.f32.mrb[0].mxu0
    %v544 = vadd.f32 %v446, %v543
    %v545 = vpop.f32.mrb[0].mxu0
    %v546 = vadd.f32 %v446, %v545
    %547 = vmatprep.mubr.f32.mxu0 0.0
    %548 = vmatmul.mubr.f32.gmra.mrb[0].mxu0 %v463
    %v549 = vpop.f32.mrb[0].mxu0
    %v550 = vadd.f32 %v451, %v549
    %v551 = vpop.f32.mrb[0].mxu0
    %v552 = vadd.f32 %v451, %v551
    %553 = vdwg.mxu0
    %v554 = vtanh.pop %v532
    %v555 = vtanh.pop %v534
    %v556 = vtanh.pop %v538
    %v557 = vtanh.pop %v540
    %v558 = vtanh.pop %v544
    %v559 = vtanh.pop %v546
    %v560 = vtanh.pop %v550
    %v561 = vtanh.pop %v552
    %s562 = scalar_lea.vmem %s3, 64
    %v563 = vld [vmem:[%s562] sm:$0xff]
    %v564 = vld [vmem:[%s562 + $0x8] sm:$0xff]
    %v565 = vld [vmem:[%s562 + $0x10] sm:$0xff]
    %v566 = vld [vmem:[%s562 + $0x18] sm:$0xff]
    %s567 = scalar_lea.vmem %s4, 64
    %v568 = vld [vmem:[%s567] sm:$0xff]
    %v569 = vld [vmem:[%s567 + $0x8] sm:$0xff]
    %v570 = vld [vmem:[%s567 + $0x10] sm:$0xff]
    %v571 = vld [vmem:[%s567 + $0x18] sm:$0xff]
    %573 = vset.pattern.permute.xlu0 0
    %574 = vperm.xlu0 %573, %v568
    %v575 = vpop.permute.xlu0 %574
    %578 = vset.pattern.permute.xlu0 0
    %579 = vperm.xlu0 %578, %v569
    %v580 = vpop.permute.xlu0 %579
    %583 = vset.pattern.permute.xlu0 0
    %584 = vperm.xlu0 %583, %v570
    %v585 = vpop.permute.xlu0 %584
    %588 = vset.pattern.permute.xlu0 0
    %589 = vperm.xlu0 %588, %v571
    %v590 = vpop.permute.xlu0 %589
    %v593 = vsel %vm313, %v563, 0
    %v596 = vsel %vm313, %v564, 0
    %v599 = vsel %vm313, %v565, 0
    %v602 = vsel %vm313, %v566, 0
    %604 = vmatprep.subr.mxu0 %v555
    %605 = vmatpush1.msra.mxu0 %v554
    %606 = vmatprep.subr.mxu0 %v557
    %607 = vmatpush1.msra.mxu0 %v556
    %608 = vmatprep.subr.mxu0 %v559
    %609 = vmatpush1.msra.mxu0 %v558
    %610 = vmatprep.subr.mxu0 %v561
    %611 = vmatpush1.msra.mxu0 %v560
    %612 = vmatprep.subr.mxu0 0.0
    %613 = vmatpush1.msra.mxu0 0.0
    %614 = vmatprep.subr.mxu0 0.0
    %615 = vmatpush1.msra.mxu0 0.0
    %616 = vmatprep.subr.mxu0 0.0
    %617 = vmatpush1.msra.mxu0 0.0
    %618 = vmatprep.subr.mxu0 0.0
    %619 = vmatpush1.msra.mxu0 0.0
    %620 = vmatprep.subr.mxu0 0.0
    %621 = vmatpush1.msra.mxu0 0.0
    %622 = vmatprep.subr.mxu0 0.0
    %623 = vmatpush1.msra.mxu0 0.0
    %624 = vmatprep.subr.mxu0 0.0
    %625 = vmatpush1.msra.mxu0 0.0
    %626 = vmatprep.subr.mxu0 0.0
    %627 = vmatpush1.msra.mxu0 0.0
    %628 = vmatprep.subr.mxu0 0.0
    %629 = vmatpush1.msra.mxu0 0.0
    %630 = vmatprep.subr.mxu0 0.0
    %631 = vmatpush1.msra.mxu0 0.0
    %632 = vmatprep.subr.mxu0 0.0
    %633 = vmatpush1.msra.mxu0 0.0
    %634 = vmatprep.subr.mxu0 0.0
    %635 = vmatpush1.msra.mxu0 0.0
    %636 = vmatprep.subr.mxu0 0.0
    %637 = vmatpush1.msra.mxu0 0.0
    %638 = vmatprep.subr.mxu0 0.0
    %639 = vmatpush1.msra.mxu0 0.0
    %640 = vmatprep.subr.mxu0 0.0
    %641 = vmatpush1.msra.mxu0 0.0
    %642 = vmatprep.subr.mxu0 0.0
    %643 = vmatpush1.msra.mxu0 0.0
    %644 = vmatprep.subr.mxu0 0.0
    %645 = vmatpush1.msra.mxu0 0.0
    %646 = vmatprep.subr.mxu0 0.0
    %647 = vmatpush1.msra.mxu0 0.0
    %648 = vmatprep.subr.mxu0 0.0
    %649 = vmatpush1.msra.mxu0 0.0
    %650 = vmatprep.subr.mxu0 0.0
    %651 = vmatpush1.msra.mxu0 0.0
    %652 = vmatprep.subr.mxu0 0.0
    %653 = vmatpush1.msra.mxu0 0.0
    %654 = vmatprep.subr.mxu0 0.0
    %655 = vmatpush1.msra.mxu0 0.0
    %656 = vmatprep.subr.mxu0 0.0
    %657 = vmatpush1.msra.mxu0 0.0
    %658 = vmatprep.subr.mxu0 0.0
    %659 = vmatpush1.msra.mxu0 0.0
    %660 = vmatprep.subr.mxu0 0.0
    %661 = vmatpush1.msra.mxu0 0.0
    %662 = vmatprep.subr.mxu0 0.0
    %663 = vmatpush1.msra.mxu0 0.0
    %664 = vmatprep.subr.mxu0 0.0
    %665 = vmatpush1.msra.mxu0 0.0
    %666 = vmatprep.subr.mxu0 0.0
    %667 = vmatpush1.msra.mxu0 0.0
    %668 = vmatprep.mubr.f32.mxu0 0.0
    %669 = vmatmul.mubr.f32.gmra.mrb[0].mxu0 %v593
    %v670 = vpop.f32.mrb[0].mxu0
    %v671 = vadd.f32 %v575, %v670
    %v672 = vpop.f32.mrb[0].mxu0
    %v673 = vadd.f32 %v575, %v672
    %674 = vmatprep.mubr.f32.mxu0 0.0
    %675 = vmatmul.mubr.f32.gmra.mrb[0].mxu0 %v596
    %v676 = vpop.f32.mrb[0].mxu0
    %v677 = vadd.f32 %v580, %v676
    %v678 = vpop.f32.mrb[0].mxu0
    %v679 = vadd.f32 %v580, %v678
    %680 = vmatprep.mubr.f32.mxu0 0.0
    %681 = vmatmul.mubr.f32.gmra.mrb[0].mxu0 %v599
    %v682 = vpop.f32.mrb[0].mxu0
    %v683 = vadd.f32 %v585, %v682
    %v684 = vpop.f32.mrb[0].mxu0
    %v685 = vadd.f32 %v585, %v684
    %686 = vmatprep.mubr.f32.mxu0 0.0
    %687 = vmatmul.mubr.f32.gmra.mrb[0].mxu0 %v602
    %v688 = vpop.f32.mrb[0].mxu0
    %v689 = vadd.f32 %v590, %v688
    %v690 = vpop.f32.mrb[0].mxu0
    %v691 = vadd.f32 %v590, %v690
    %692 = vdwg.mxu0
    %v693 = vtanh.pop %v671
    %v694 = vtanh.pop %v673
    %v695 = vtanh.pop %v677
    %v696 = vtanh.pop %v679
    %v697 = vtanh.pop %v683
    %v698 = vtanh.pop %v685
    %v699 = vtanh.pop %v689
    %v700 = vtanh.pop %v691
    %v701 = vld [vmem:[%s5] sm:$0x3]
    %v702 = vld [vmem:[%s6] sm:$0x3]
    %704 = vset.pattern.permute.xlu0 0
    %705 = vperm.xlu0 %704, %v702
    %v706 = vpop.permute.xlu0 %705
    %v709 = vsel %vm313, %v701, 0
    %711 = vmatprep.subr.mxu0 %v694
    %712 = vmatpush1.msra.mxu0 %v693
    %713 = vmatprep.subr.mxu0 %v696
    %714 = vmatpush1.msra.mxu0 %v695
    %715 = vmatprep.subr.mxu0 %v698
    %716 = vmatpush1.msra.mxu0 %v697
    %717 = vmatprep.subr.mxu0 %v700
    %718 = vmatpush1.msra.mxu0 %v699
    %719 = vmatprep.subr.mxu0 0.0
    %720 = vmatpush1.msra.mxu0 0.0
    %721 = vmatprep.subr.mxu0 0.0
    %722 = vmatpush1.msra.mxu0 0.0
    %723 = vmatprep.subr.mxu0 0.0
    %724 = vmatpush1.msra.mxu0 0.0
    %725 = vmatprep.subr.mxu0 0.0
    %726 = vmatpush1.msra.mxu0 0.0
    %727 = vmatprep.subr.mxu0 0.0
    %728 = vmatpush1.msra.mxu0 0.0
    %729 = vmatprep.subr.mxu0 0.0
    %730 = vmatpush1.msra.mxu0 0.0
    %731 = vmatprep.subr.mxu0 0.0
    %732 = vmatpush1.msra.mxu0 0.0
    %733 = vmatprep.subr.mxu0 0.0
    %734 = vmatpush1.msra.mxu0 0.0
    %735 = vmatprep.subr.mxu0 0.0
    %736 = vmatpush1.msra.mxu0 0.0
    %737 = vmatprep.subr.mxu0 0.0
    %738 = vmatpush1.msra.mxu0 0.0
    %739 = vmatprep.subr.mxu0 0.0
    %740 = vmatpush1.msra.mxu0 0.0
    %741 = vmatprep.subr.mxu0 0.0
    %742 = vmatpush1.msra.mxu0 0.0
    %743 = vmatprep.subr.mxu0 0.0
    %744 = vmatpush1.msra.mxu0 0.0
    %745 = vmatprep.subr.mxu0 0.0
    %746 = vmatpush1.msra.mxu0 0.0
    %747 = vmatprep.subr.mxu0 0.0
    %748 = vmatpush1.msra.mxu0 0.0
    %749 = vmatprep.subr.mxu0 0.0
    %750 = vmatpush1.msra.mxu0 0.0
    %751 = vmatprep.subr.mxu0 0.0
    %752 = vmatpush1.msra.mxu0 0.0
    %753 = vmatprep.subr.mxu0 0.0
    %754 = vmatpush1.msra.mxu0 0.0
    %755 = vmatprep.subr.mxu0 0.0
    %756 = vmatpush1.msra.mxu0 0.0
    %757 = vmatprep.subr.mxu0 0.0
    %758 = vmatpush1.msra.mxu0 0.0
    %759 = vmatprep.subr.mxu0 0.0
    %760 = vmatpush1.msra.mxu0 0.0
    %761 = vmatprep.subr.mxu0 0.0
    %762 = vmatpush1.msra.mxu0 0.0
    %763 = vmatprep.subr.mxu0 0.0
    %764 = vmatpush1.msra.mxu0 0.0
    %765 = vmatprep.subr.mxu0 0.0
    %766 = vmatpush1.msra.mxu0 0.0
    %767 = vmatprep.subr.mxu0 0.0
    %768 = vmatpush1.msra.mxu0 0.0
    %769 = vmatprep.subr.mxu0 0.0
    %770 = vmatpush1.msra.mxu0 0.0
    %771 = vmatprep.subr.mxu0 0.0
    %772 = vmatpush1.msra.mxu0 0.0
    %773 = vmatprep.subr.mxu0 0.0
    %774 = vmatpush1.msra.mxu0 0.0
    %775 = vmatprep.mubr.f32.mxu0 0.0
    %776 = vmatmul.mubr.f32.gmra.mrb[0].mxu0 %v709
    %v777 = vpop.f32.mrb[0].mxu0
    %v778 = vadd.f32 %v706, %v777
    %v779 = vpop.f32.mrb[0].mxu0
    %v780 = vadd.f32 %v706, %v779
    %781 = vdwg.mxu0
    %v784 = vcombine.low %v778, %v780
    %v786 = vunpack.c.l.s4 1983009808
    %v787 = vunpack.c.0.s8 %v786
    %v788 = vlaneseq
    %v789 = vshrl.u32 %v788, 7
    %v790 = vsub.s32 %v787, %v789
    %v791 = vrot.slane %v784, %v790
    %793 = vst [vmem:[#allocation2] sm:$0xf] %v791
    // Predicated region
    $region30: #{tpu_custom_call.1} parent=1 // pred_check
      _
    $region31: #{tpu_custom_call.1} parent=1 // pred_check_branch
      %795 = sbr.rel (0) target = $region33
    $region32: #{tpu_custom_call.1} parent=1 // pred_region
      %s797 = ssub.s32 64, 64
      %798 = vsyncadd [#allocation3], %s797
      %s800 = sshll.u32 [#allocation2], 4
      %s801 = int_to_ptr.vmem [resolvable:$true] %s800
      %803 = dma.vmem_to_hbm [thread:$0]  %s801, 64, %s7, [#allocation3]
    $region33: #{tpu_custom_call.1} parent=1 // pred_fallthru
      _
    // Predicated region
    $region34: #{tpu_custom_call.1} parent=1 // pred_check
      _
    $region35: #{tpu_custom_call.1} parent=1 // pred_check_branch
      %805 = sbr.rel (0) target = $region37
    $region36: #{tpu_custom_call.1} parent=1 // pred_region
      %806 = dma.done [#allocation3], 64
    $region37: #{tpu_custom_call.1} parent=1 // pred_fallthru
      _
    %807 = vsyncpa [#allocation3], 1

</llo_original>
